<compile_context>
chip_gen: v7x
topology: tpu7x:2x2x1
jax: 0.10.0
libtpu: 0.0.40
codegen_flags: <defaults>
</compile_context>

<pallas_src>
import jax
import jax.numpy as jnp
from jax.experimental import pallas as pl
from jax.experimental.pallas import tpu as pltpu


def _round_up(x, m):
    return (x + m - 1) // m * m


def _pprelu_kernel(x_ref, w1_ref, w2_ref, o_ref):
    # x_ref: (TR, THW) tile; w*_ref: (TR, 1) per-row scales (broadcast over lanes).
    x = x_ref[...]
    w1 = w1_ref[...]
    w2 = w2_ref[...]
    o_ref[...] = jnp.maximum(x * w1, x * w2).astype(o_ref.dtype)


def pprelu(x_nchw, w1, w2):
    """PPReLU: y = max(x * w1, x * w2) with per-channel scales.

    x_nchw: (N, C, H, W); w1, w2: (1, C, 1, 1).
    """
    N, C, H, W = x_nchw.shape
    HW = H * W
    rows = N * C
    dtype = x_nchw.dtype
    itemsize = jnp.dtype(dtype).itemsize

    # Sublane packing: 8 rows/vreg for 4-byte, 16 for 2-byte, 32 for 1-byte.
    sub = max(8, 32 // itemsize)

    # Lane-dense spatial tile (multiple of 128, <=1024) and row tile.
    thw = min(1024, _round_up(HW, 128))
    tr = min(256, _round_up(rows, sub))
    hw_pad = _round_up(HW, thw)
    rows_pad = _round_up(rows, tr)

    # 2D layout: (N*C, HW); pad so every block is full and stores are unmasked.
    x2 = x_nchw.reshape(rows, HW)
    if hw_pad != HW:
        x2 = jnp.pad(x2, ((0, 0), (0, hw_pad - HW)))
    if rows_pad != rows:
        x2 = jnp.pad(x2, ((0, rows_pad - rows), (0, 0)))

    # Per-row scales (rows_pad, 1) in the input dtype (no upcast).
    def _row_scales(w):
        w_rows = jnp.broadcast_to(w.reshape(1, C), (N, C)).reshape(rows, 1)
        w_rows = w_rows.astype(dtype)
        if rows_pad != rows:
            w_rows = jnp.pad(w_rows, ((0, rows_pad - rows), (0, 0)))
        return w_rows

    w1_rows = _row_scales(w1)
    w2_rows = _row_scales(w2)

    grid = (rows_pad // tr, hw_pad // thw)

    out = pl.pallas_call(
        _pprelu_kernel,
        out_shape=jax.ShapeDtypeStruct((rows_pad, hw_pad), dtype),
        grid_spec=pltpu.PrefetchScalarGridSpec(
            num_scalar_prefetch=0,
            grid=grid,
            in_specs=[
                pl.BlockSpec((tr, thw), lambda i, j: (i, j)),
                pl.BlockSpec((tr, 1), lambda i, j: (i, 0)),
                pl.BlockSpec((tr, 1), lambda i, j: (i, 0)),
            ],
            out_specs=pl.BlockSpec((tr, thw), lambda i, j: (i, j)),
        ),
        compiler_params=pltpu.CompilerParams(
            dimension_semantics=("parallel", "parallel"),
        ),
    )(x2, w1_rows, w2_rows)

    out = out[:rows, :HW]
    return out.reshape(N, C, H, W)


if __name__ == "__main__":
    key = jax.random.PRNGKey(0)
    N, C, H, W = 2, 4, 16, 16

    x = jax.random.normal(key, (N, C, H, W), dtype=jnp.float32)

    # Deterministic parameter init, matching Scale.reset_parameters:
    #   scale1: fill(1.0), no bias; scale2: fill(0.1), no bias.
    w1 = jnp.full((1, C, 1, 1), 1.0, dtype=jnp.float32)
    w2 = jnp.full((1, C, 1, 1), 0.1, dtype=jnp.float32)

    y = pprelu(x, w1, w2)
    jax.block_until_ready(y)

    # Reference check (plain JAX, same semantics as the PyTorch module).
    y_ref = jnp.maximum(x * w1, x * w2)
    assert y.shape == (N, C, H, W)
    assert jnp.allclose(y, y_ref, atol=1e-6, rtol=1e-6)

    print("KERNEL_OK")
</pallas_src>

<mosaic_0001>
module attributes {stable_mosaic.version = 11 : i64} {
  func.func @_pprelu_kernel(%arg0: i32, %arg1: i32, %arg2: memref<8x256xf32, #tpu.memory_space<vmem>>, %arg3: memref<8x1xf32, #tpu.memory_space<vmem>>, %arg4: memref<8x1xf32, #tpu.memory_space<vmem>>, %arg5: memref<8x256xf32, #tpu.memory_space<vmem>>) attributes {dimension_semantics = [#tpu.dimension_semantics<parallel>, #tpu.dimension_semantics<parallel>], iteration_bounds = array<i64: 1, 1>, scalar_prefetch = 0 : i64, scratch_operands = 0 : i64, tpu.core_type = #tpu.core_type<tc>, window_params = [{transform_indices = @transform_0, window_bounds = array<i64: 8, 256>}, {transform_indices = @transform_1, window_bounds = array<i64: 8, 1>}, {transform_indices = @transform_2, window_bounds = array<i64: 8, 1>}, {transform_indices = @transform_3, window_bounds = array<i64: 8, 256>}]} {
    %c0 = arith.constant 0 : index
    %c0_0 = arith.constant 0 : index
    %0 = vector.load %arg2[%c0, %c0_0] : memref<8x256xf32, #tpu.memory_space<vmem>>, vector<8x256xf32>
    %c0_1 = arith.constant 0 : index
    %c0_2 = arith.constant 0 : index
    %1 = vector.load %arg3[%c0_1, %c0_2] : memref<8x1xf32, #tpu.memory_space<vmem>>, vector<8x1xf32>
    %c0_3 = arith.constant 0 : index
    %c0_4 = arith.constant 0 : index
    %2 = vector.load %arg4[%c0_3, %c0_4] : memref<8x1xf32, #tpu.memory_space<vmem>>, vector<8x1xf32>
    %3 = vector.broadcast %1 : vector<8x1xf32> to vector<8x256xf32>
    %4 = arith.mulf %0, %3 : vector<8x256xf32>
    %5 = vector.broadcast %2 : vector<8x1xf32> to vector<8x256xf32>
    %6 = arith.mulf %0, %5 : vector<8x256xf32>
    %7 = arith.maximumf %4, %6 : vector<8x256xf32>
    %c0_5 = arith.constant 0 : index
    %c0_6 = arith.constant 0 : index
    %8 = vector.load %arg5[%c0_5, %c0_6] : memref<8x256xf32, #tpu.memory_space<vmem>>, vector<8x256xf32>
    tpu.vector_store %arg5[%c0_5, %c0_6], %7 {strides = array<i32>} : memref<8x256xf32, #tpu.memory_space<vmem>>, vector<8x256xf32>,
    return
  }
  func.func @transform_0(%arg0: i32, %arg1: i32) -> (i32, i32) {
    %c0_i32 = arith.constant 0 : i32
    return %arg0, %arg1 : i32, i32
  }
  func.func @transform_1(%arg0: i32, %arg1: i32) -> (i32, i32) {
    %c0_i32 = arith.constant 0 : i32
    %c0_i32_0 = arith.constant 0 : i32
    return %arg0, %c0_i32 : i32, i32
  }
  func.func @transform_2(%arg0: i32, %arg1: i32) -> (i32, i32) {
    %c0_i32 = arith.constant 0 : i32
    %c0_i32_0 = arith.constant 0 : i32
    return %arg0, %c0_i32 : i32, i32
  }
  func.func @transform_3(%arg0: i32, %arg1: i32) -> (i32, i32) {
    %c0_i32 = arith.constant 0 : i32
    return %arg0, %arg1 : i32, i32
  }
}

</mosaic_0001>

<llo_original>
// kernel: tpu_custom_call.1
$region0: #{tpu_custom_call.1}
  #allocation0 [shape = 'u32[]', space=smem, size = 0x4, offset = 0x4, fixed_abs, tag = 'smem constant byte address 0x4 - core index']
  #allocation1 [shape = 'u32[144,128]{1,0:T(1,128)}', space=vmem, size = 0x12000, scoped, tag = 'internal scratch']
  %s0 = inlined_call_operand.vmem [shape: f32[8,256], index: 0, kind: input, shape index: {}]
  %s1 = inlined_call_operand.vmem [shape: f32[8,1], index: 1, kind: input, shape index: {}]
  %s2 = inlined_call_operand.vmem [shape: f32[8,1], index: 2, kind: input, shape index: {}]
  %s3 = inlined_call_operand.hbm [shape: f32[8,256], index: 3, kind: output, shape index: {}]
  %s4 = sld [smem:[#allocation0]]
  $region22: #{tpu_custom_call.1} parent=0
    _
  %s6 = ssub.s32 1, %s4
  %s7 = scalar_select 0, %s6, %s4
  $region1: #{tpu_custom_call.1} parent=0
    #allocation2 [shape = 'u8[8192]{0}', space=vmem, size = 0x2000, scoped, tag = 'output window, operand 0, single buffered']
    #allocation3 [shape = 's32[1]{0}', space=sflag, size = 0x4, scoped, tag = 'scoped memory for tpu_custom_call.1']
    %8 = vsyncpa [#allocation3], 0
    // Predicated region
    $region2: #{tpu_custom_call.1} parent=1 // pred_check
      _
    $region3: #{tpu_custom_call.1} parent=1 // pred_check_branch
      %10 = sbr.rel (0) target = $region5
    $region4: #{tpu_custom_call.1} parent=1 // pred_region
      _
    $region5: #{tpu_custom_call.1} parent=1 // pred_fallthru
      _
    // Predicated region
    $region6: #{tpu_custom_call.1} parent=1 // pred_check
      _
    $region7: #{tpu_custom_call.1} parent=1 // pred_check_branch
      %12 = sbr.rel (0) target = $region9
    $region8: #{tpu_custom_call.1} parent=1 // pred_region
      _
    $region9: #{tpu_custom_call.1} parent=1 // pred_fallthru
      _
    // Predicated region
    $region10: #{tpu_custom_call.1} parent=1 // pred_check
      _
    $region11: #{tpu_custom_call.1} parent=1 // pred_check_branch
      %14 = sbr.rel (0) target = $region13
    $region12: #{tpu_custom_call.1} parent=1 // pred_region
      _
    $region13: #{tpu_custom_call.1} parent=1 // pred_fallthru
      _
    %v15 = vld [vmem:[%s0] sm:$0xff]
    %v16 = vld [vmem:[%s0 + $0x8] sm:$0xff]
    %v17 = vld [vmem:[%s1] sm:$0xff]
    %v18 = vld [vmem:[%s2] sm:$0xff]
    %20 = vset.pattern.permute.xlu0 0
    %21 = vperm.xlu0 %20, %v17
    %v22 = vpop.permute.xlu0 %21
    %v24 = vmul.f32 %v15, %v22
    %v25 = vmul.f32 %v16, %v22
    %27 = vset.pattern.permute.xlu0 0
    %28 = vperm.xlu0 %27, %v18
    %v29 = vpop.permute.xlu0 %28
    %v31 = vmul.f32 %v15, %v29
    %v32 = vmul.f32 %v16, %v29
    %v33 = vmax.f32 %v24, %v31
    %v34 = vmax.f32 %v25, %v32
    %35 = vst [vmem:[#allocation2] sm:$0xff] %v33
    %36 = vst [vmem:[#allocation2 + $0x8] sm:$0xff] %v34
    // Predicated region
    $region14: #{tpu_custom_call.1} parent=1 // pred_check
      _
    $region15: #{tpu_custom_call.1} parent=1 // pred_check_branch
      %38 = sbr.rel (0) target = $region17
    $region16: #{tpu_custom_call.1} parent=1 // pred_region
      %s40 = ssub.s32 256, 256
      %41 = vsyncadd [#allocation3], %s40
      %s43 = sshll.u32 [#allocation2], 4
      %s44 = int_to_ptr.vmem [resolvable:$true] %s43
      %46 = dma.vmem_to_hbm [thread:$0]  %s44, 256, %s3, [#allocation3]
    $region17: #{tpu_custom_call.1} parent=1 // pred_fallthru
      _
    // Predicated region
    $region18: #{tpu_custom_call.1} parent=1 // pred_check
      _
    $region19: #{tpu_custom_call.1} parent=1 // pred_check_branch
      %48 = sbr.rel (0) target = $region21
    $region20: #{tpu_custom_call.1} parent=1 // pred_region
      %49 = dma.done [#allocation3], 256
    $region21: #{tpu_custom_call.1} parent=1 // pred_fallthru
      _
    %50 = vsyncpa [#allocation3], 1

</llo_original>
